<compile_context>
chip_gen: v6e
topology: v6e:2x2x1
jax: 0.10.0
libtpu: 0.0.40
codegen_flags: <defaults>
</compile_context>

<pallas_src>
import functools
import numpy as np
import jax
import jax.numpy as jnp
from jax.experimental import pallas as pl
from jax.experimental.pallas import tpu as pltpu


# ----------------------------------------------------------------------------
# helpers
# ----------------------------------------------------------------------------

_VMEM_LIMIT_BYTES = 32 * 1024 * 1024     # <= v7x physical (64 MiB), raises v5e default
_TARGET_BLOCK_BYTES = 4 * 1024 * 1024    # ~4 MiB of input bytes per grid step


def _pick_rows(rows, bytes_per_row, align, target_bytes=_TARGET_BLOCK_BYTES):
    """Largest row tile whose per-step input bytes stay under `target_bytes`.

    The tile is either the full row extent (exempt from the second-minor
    alignment constraint) or a multiple of `align` (8 for f32/i32, 32 for int8).
    """
    rows = max(int(rows), 1)
    cap = max(1, int(target_bytes) // max(int(bytes_per_row), 1))
    if rows <= cap:
        return rows
    return max(align, (cap // align) * align)


def _softplus(x):
    # log(1 + exp(x)) without overflow.
    return jnp.maximum(x, 0.0) + jnp.log(1.0 + jnp.exp(-jnp.abs(x)))


# ----------------------------------------------------------------------------
# Pallas kernels
# ----------------------------------------------------------------------------

def _obj_ce_card_kernel(logits_ref, tgt_ref, lens_ref, out_ref,
                        ce_acc_ref, card_acc_ref, *, n_rows, num_obj, eos_coef):
    """Fused weighted cross-entropy + cardinality for one (layer, row-tile).

    logits: [1, bn, Q, C+1] f32;  tgt: [1, bn, Q] i32 dense class map;
    lens:   [1, bn, 1] f32 per-row GT count.
    out (SMEM, whole [L, 3]): per-layer (sum w*nll, sum w, sum |card - len|).
    Per-tile terms are accumulated elementwise in VMEM scratch and reduced to
    scalars only on the layer's last tile (no per-step XLU reduce / SMEM RMW).
    """
    l = pl.program_id(0)
    i = pl.program_id(1)

    @pl.when(i == 0)
    def _():
        ce_acc_ref[...] = jnp.zeros_like(ce_acc_ref)
        card_acc_ref[...] = jnp.zeros_like(card_acc_ref)

    x = logits_ref[0].astype(jnp.float32)                        # [bn,Q,C+1]
    t = tgt_ref[0]                                               # [bn,Q]
    lens = lens_ref[0]                                           # [bn,1]
    bn = x.shape[0]

    # in-kernel row mask (replaces the host-side jnp.pad of the logits)
    row = i * bn + jax.lax.broadcasted_iota(jnp.int32, (bn, 1), 0)
    valid = row < n_rows                                         # [bn,1] bool
    validf = valid.astype(jnp.float32)
    x = jnp.where(valid[:, :, None], x, 0.0)                     # sanitize overhang

    # nll = lse - x[target] via one-hot (no full log-softmax tensor)
    m = jnp.max(x, axis=-1, keepdims=True)
    lse = jnp.log(jnp.sum(jnp.exp(x - m), axis=-1, keepdims=True)) + m
    cls = jax.lax.broadcasted_iota(jnp.int32, x.shape, 2)
    onehot = (cls == t[:, :, None]).astype(jnp.float32)
    x_tgt = jnp.sum(onehot * x, axis=-1)                         # [bn,Q]
    nll = lse[..., 0] - x_tgt
    # per-query CE weight straight from the integer target: valid because
    # empty_weight is all-ones except the eos slot (= eos_coef) by construction.
    wt = jnp.where(t == num_obj, eos_coef, 1.0) * validf
    ce_acc_ref[0] += wt * nll
    ce_acc_ref[1] += wt

    # cardinality: proxy for argmax != C-1 (ties resolve toward foreground, same
    # as torch.argmax's first-max rule since foreground indices precede no-object).
    no_obj = x[..., num_obj:num_obj + 1]
    best_fg = jnp.max(x[..., :num_obj], axis=-1, keepdims=True)
    is_obj = (best_fg >= no_obj).astype(jnp.float32)             # [bn,Q,1]
    card = jnp.sum(is_obj, axis=1)                               # [bn,1]
    card_acc_ref[...] += jnp.abs(card - lens) * validf

    @pl.when(i == pl.num_programs(1) - 1)
    def _():
        out_ref[l, 0] = jnp.sum(ce_acc_ref[0])
        out_ref[l, 1] = jnp.sum(ce_acc_ref[1])
        out_ref[l, 2] = jnp.sum(card_acc_ref[...])


def _verb_focal_kernel(logits_ref, gt_ref, out_ref, acc_ref, *, n_rows):
    """Modified (CornerNet-style) focal loss partial sums for one (layer, row-tile).

    logits: [1, bn, V] f32;  gt: [1, bn, V] int8 binary multi-hot.
    out (SMEM, whole [L, 3]): per-layer (sum pos_loss, sum neg_loss, num_pos).
    """
    l = pl.program_id(0)
    i = pl.program_id(1)

    @pl.when(i == 0)
    def _():
        acc_ref[...] = jnp.zeros_like(acc_ref)

    x = logits_ref[0].astype(jnp.float32)                        # [bn,V]
    g = gt_ref[0].astype(jnp.int32)
    bn = x.shape[0]
    row = i * bn + jax.lax.broadcasted_iota(jnp.int32, (bn, 1), 0)
    valid = row < n_rows                                         # [bn,1] bool
    x = jnp.where(valid, x, 0.0)                                 # sanitize overhang

    # one sigmoid + one softplus per element (log_q = log_p - x, q = 1 - p)
    p = jax.nn.sigmoid(x)
    log_p = -_softplus(-x)                                       # log sigmoid(x)
    log_q = log_p - x                                            # log(1 - sigmoid(x))
    q = 1.0 - p
    pos = jnp.logical_and(g == 1, valid).astype(jnp.float32)
    neg = jnp.logical_and(g < 1, valid).astype(jnp.float32)
    acc_ref[0] += log_p * q * q * pos
    acc_ref[1] += log_q * p * p * neg
    acc_ref[2] += pos

    @pl.when(i == pl.num_programs(1) - 1)
    def _():
        out_ref[l, 0] = jnp.sum(acc_ref[0])
        out_ref[l, 1] = jnp.sum(acc_ref[1])
        out_ref[l, 2] = jnp.sum(acc_ref[2])


def _verb_bce_kernel(logits_ref, gt_ref, out_ref, acc_ref, *, n_rows):
    """BCE-with-logits partial sum: bce = softplus(x) - g*x (single softplus)."""
    l = pl.program_id(0)
    i = pl.program_id(1)

    @pl.when(i == 0)
    def _():
        acc_ref[...] = jnp.zeros_like(acc_ref)

    x = logits_ref[0].astype(jnp.float32)
    g = gt_ref[0].astype(jnp.float32)
    bn = x.shape[0]
    row = i * bn + jax.lax.broadcasted_iota(jnp.int32, (bn, 1), 0)
    valid = row < n_rows
    validf = valid.astype(jnp.float32)
    x = jnp.where(valid, x, 0.0)
    acc_ref[0] += (_softplus(x) - g * x) * validf

    @pl.when(i == pl.num_programs(1) - 1)
    def _():
        out_ref[l, 0] = jnp.sum(acc_ref[0])


def _box_losses_kernel(m_ref, boxes_ref, out_ref):
    """Lane-dense box losses for one decoder layer.

    boxes: [1, 16, Mp] f32 -- rows 0-3 src_sub (cx,cy,w,h), 4-7 src_obj,
    8-11 tgt_sub, 12-15 tgt_obj; matches live on the 128-wide lane axis.
    m (SMEM [L] i32): real match count of this layer.
    out (SMEM [L, 5]): (l1_sub, l1_obj*exist, 1-giou_sub, (1-giou_obj)*exist, sum exist)
    """
    l = pl.program_id(0)
    m = m_ref[l]
    d = boxes_ref[0]                                             # [16, Mp]
    ss, so = d[0:4, :], d[4:8, :]
    ts, to = d[8:12, :], d[12:16, :]

    col = jax.lax.broadcasted_iota(jnp.int32, (1, d.shape[1]), 1)
    valid = (col < m).astype(jnp.float32)                        # [1,Mp]
    exist = (jnp.max(jnp.abs(to), axis=0, keepdims=True) > 0.0).astype(jnp.float32) * valid

    l1_sub = jnp.abs(ss - ts)
    l1_obj = jnp.abs(so - to)

    eps = 1e-7

    def giou(a, b):
        ax0 = a[0:1] - 0.5 * a[2:3]; ay0 = a[1:2] - 0.5 * a[3:4]
        ax1 = a[0:1] + 0.5 * a[2:3]; ay1 = a[1:2] + 0.5 * a[3:4]
        bx0 = b[0:1] - 0.5 * b[2:3]; by0 = b[1:2] - 0.5 * b[3:4]
        bx1 = b[0:1] + 0.5 * b[2:3]; by1 = b[1:2] + 0.5 * b[3:4]
        area_a = (ax1 - ax0) * (ay1 - ay0)
        area_b = (bx1 - bx0) * (by1 - by0)
        iw = jnp.maximum(jnp.minimum(ax1, bx1) - jnp.maximum(ax0, bx0), 0.0)
        ih = jnp.maximum(jnp.minimum(ay1, by1) - jnp.maximum(ay0, by0), 0.0)
        inter = iw * ih
        union = area_a + area_b - inter
        iou = inter / (union + eps)
        ew = jnp.maximum(ax1, bx1) - jnp.minimum(ax0, bx0)
        eh = jnp.maximum(ay1, by1) - jnp.minimum(ay0, by0)
        earea = jnp.maximum(ew, 0.0) * jnp.maximum(eh, 0.0)
        return iou - (earea - union) / (earea + eps)             # [1,Mp]

    g_sub = giou(ss, ts)
    g_obj = giou(so, to)

    out_ref[l, 0] = jnp.sum(l1_sub * valid)
    out_ref[l, 1] = jnp.sum(l1_obj * exist)
    out_ref[l, 2] = jnp.sum((1.0 - g_sub) * valid)
    out_ref[l, 3] = jnp.sum((1.0 - g_obj) * exist)
    out_ref[l, 4] = jnp.sum(exist)


# ----------------------------------------------------------------------------
# Criterion (JAX / Pallas port of SetCriterionHOI.forward with use_consis=False)
# ----------------------------------------------------------------------------

class SetCriterionHOI:

    def __init__(self, num_obj_classes, num_queries, num_verb_classes, matcher,
                 weight_dict, eos_coef, losses, verb_loss_type):
        assert verb_loss_type == 'bce' or verb_loss_type == 'focal'
        self.num_obj_classes = num_obj_classes
        self.num_queries = num_queries
        self.num_verb_classes = num_verb_classes
        self.matcher = matcher
        self.weight_dict = weight_dict
        self.eos_coef = eos_coef
        self.losses = losses
        self.verb_loss_type = verb_loss_type
        # Kept for API parity; the kernel derives the CE weight from eos_coef
        # directly (all-ones except the last entry, by this construction).
        self.empty_weight = jnp.ones((num_obj_classes + 1,), jnp.float32).at[-1].set(eos_coef)

    # -- matcher index flattening (tiny host arrays) -------------------------
    @staticmethod
    def _flat_match(indices, P):
        flat, srcq, tgtq = [], [], []
        for b, indice in enumerate(indices):
            for p, (src, tgt) in enumerate(indice):
                src = np.asarray(src, np.int32)
                tgt = np.asarray(tgt, np.int32)
                flat.append(np.full_like(src, b * P + p))
                srcq.append(src)
                tgtq.append((b, tgt))
        flat = np.concatenate(flat) if flat else np.zeros((0,), np.int32)
        srcq = np.concatenate(srcq) if srcq else np.zeros((0,), np.int32)
        return flat, srcq, tgtq

    def _layer_match_data(self, targets, indices, P):
        flat, srcq, tgtq = self._flat_match(indices, P)
        V = self.num_verb_classes
        lbl = [np.asarray(targets[b]['obj_labels'], np.int32)[t] for b, t in tgtq]
        vrb = [np.asarray(targets[b]['verb_labels'], np.float32)[t] for b, t in tgtq]
        sbx = [np.asarray(targets[b]['sub_boxes'], np.float32)[t] for b, t in tgtq]
        obx = [np.asarray(targets[b]['obj_boxes'], np.float32)[t] for b, t in tgtq]
        return {
            'flat': flat, 'srcq': srcq,
            'lbl': np.concatenate(lbl) if lbl else np.zeros((0,), np.int32),
            'verbs': np.concatenate(vrb, 0) if vrb else np.zeros((0, V), np.float32),
            'sub': np.concatenate(sbx, 0) if sbx else np.zeros((0, 4), np.float32),
            'obj': np.concatenate(obx, 0) if obx else np.zeros((0, 4), np.float32),
        }

    # -- obj logits pass: CE + cardinality for every decoder layer at once ---
    def _obj_pass(self, layer_outputs, match, targets):
        L = len(layer_outputs)
        B, P, Q, C1 = layer_outputs[0]['pred_obj_logits'].shape
        N = B * P

        # one stacked [L, N, Q, C+1] tensor -> a single gridded pallas_call for
        # the main layer and every aux decoder layer.
        if L == 1:
            logits = layer_outputs[0]['pred_obj_logits'].reshape(1, N, Q, C1)
        else:
            logits = jnp.stack(
                [o['pred_obj_logits'].reshape(N, Q, C1) for o in layer_outputs], 0)

        # dense class map for all layers, scattered on device from tiny match arrays
        lidx = np.concatenate([np.full(m['flat'].shape, li, np.int32)
                               for li, m in enumerate(match)])
        rows = np.concatenate([m['flat'] for m in match]).astype(np.int32)
        cols = np.concatenate([m['srcq'] for m in match]).astype(np.int32)
        vals = np.concatenate([m['lbl'] for m in match]).astype(np.int32)
        tc = jnp.full((L, N, Q), self.num_obj_classes, jnp.int32)
        if vals.size:
            tc = tc.at[jnp.asarray(lidx), jnp.asarray(rows), jnp.asarray(cols)].set(
                jnp.asarray(vals))

        lens_np = np.repeat(np.asarray([len(t['obj_labels']) for t in targets],
                                       np.float32), P).reshape(1, N, 1)
        lens = jnp.asarray(np.tile(lens_np, (L, 1, 1)))

        row_bytes = Q * C1 * 4 + Q * 4 + 4
        bn = _pick_rows(N, row_bytes, align=8)
        T = pl.cdiv(N, bn)
        kernel = functools.partial(_obj_ce_card_kernel, n_rows=N,
                                   num_obj=self.num_obj_classes,
                                   eos_coef=float(self.eos_coef))
        # TODO(synk): on v7x, per-core partial accumulators (core-parallel L axis)
        # would use both TensorCores; kept serial-'arbitrary' for correctness.
        return pl.pallas_call(
            kernel,
            out_shape=jax.ShapeDtypeStruct((L, 3), jnp.float32),
            grid=(L, T),
            in_specs=[
                pl.BlockSpec((1, bn, Q, C1), lambda l, i: (l, i, 0, 0)),
                pl.BlockSpec((1, bn, Q), lambda l, i: (l, i, 0)),
                pl.BlockSpec((1, bn, 1), lambda l, i: (l, i, 0)),
            ],
            out_specs=pl.BlockSpec(memory_space=pltpu.MemorySpace.SMEM),
            scratch_shapes=[pltpu.VMEM((2, bn, Q), jnp.float32),
                            pltpu.VMEM((bn, 1), jnp.float32)],
            compiler_params=pltpu.CompilerParams(
                dimension_semantics=("arbitrary", "arbitrary"),
                vmem_limit_bytes=_VMEM_LIMIT_BYTES),
        )(logits, tc, lens)

    def _class_error(self, pred_obj_logits, m0):
        if m0['lbl'].size == 0:
            return jnp.asarray(100.0, jnp.float32)
        B, P, Q, C1 = pred_obj_logits.shape
        logits = pred_obj_logits.reshape(B * P, Q, C1)
        matched = logits[jnp.asarray(m0['flat']), jnp.asarray(m0['srcq'])]
        pred = jnp.argmax(matched, axis=-1)
        acc = jnp.mean((pred == jnp.asarray(m0['lbl'])).astype(jnp.float32)) * 100.0
        return 100.0 - acc

    # -- verb_labels for every decoder layer at once --------------------------
    def _verb_pass(self, layer_outputs, match):
        L = len(layer_outputs)
        B, P, Q, V = layer_outputs[0]['pred_verb_logits'].shape
        N = B * P
        R = N * Q

        if L == 1:
            logits = layer_outputs[0]['pred_verb_logits'].reshape(1, R, V)
        else:
            logits = jnp.stack(
                [o['pred_verb_logits'].reshape(R, V) for o in layer_outputs], 0)

        # dense multi-hot GT as int8 (4x less HBM traffic than f32).
        # NOTE: assumes binary verb labels (true for this criterion's data);
        # soft labels would be truncated by the int8 cast.
        lidx = np.concatenate([np.full(m['flat'].shape, li, np.int32)
                               for li, m in enumerate(match)])
        rows = np.concatenate(
            [m['flat'].astype(np.int64) * Q + m['srcq'].astype(np.int64)
             for m in match]).astype(np.int32)
        vals = np.concatenate([m['verbs'] for m in match], axis=0).astype(np.int8)
        gt = jnp.zeros((L, R, V), jnp.int8)
        if vals.size:
            gt = gt.at[jnp.asarray(lidx), jnp.asarray(rows)].set(jnp.asarray(vals))

        row_bytes = V * 4 + V                     # f32 logits + int8 GT per row
        bn = _pick_rows(R, row_bytes, align=32)   # 32: int8 sublane packing
        T = pl.cdiv(R, bn)
        is_focal = (self.verb_loss_type == 'focal')
        ncomp = 3 if is_focal else 1
        kernel = functools.partial(
            _verb_focal_kernel if is_focal else _verb_bce_kernel, n_rows=R)
        sums = pl.pallas_call(
            kernel,
            out_shape=jax.ShapeDtypeStruct((L, ncomp), jnp.float32),
            grid=(L, T),
            in_specs=[pl.BlockSpec((1, bn, V), lambda l, i: (l, i, 0)),
                      pl.BlockSpec((1, bn, V), lambda l, i: (l, i, 0))],
            out_specs=pl.BlockSpec(memory_space=pltpu.MemorySpace.SMEM),
            scratch_shapes=[pltpu.VMEM((ncomp, bn, V), jnp.float32)],
            compiler_params=pltpu.CompilerParams(
                dimension_semantics=("arbitrary", "arbitrary"),
                vmem_limit_bytes=_VMEM_LIMIT_BYTES),
        )(logits, gt)

        if is_focal:
            pos_s, neg_s, npos = sums[:, 0], sums[:, 1], sums[:, 2]
            safe = jnp.maximum(npos, 1.0)
            return jnp.where(npos == 0, -neg_s, -(pos_s + neg_s) / safe)
        return sums[:, 0] / float(R * V)

    # -- sub/obj box losses for every decoder layer at once -------------------
    def _box_pass(self, layer_outputs, match, num_interactions, P):
        L = len(layer_outputs)
        B, P_, Q, _ = layer_outputs[0]['pred_sub_boxes'].shape
        N = B * P_
        Ms = [int(m['flat'].shape[0]) for m in match]
        Mmax = max(Ms)
        zeros = jnp.zeros((L,), jnp.float32)
        if Mmax == 0:
            return {'loss_sub_bbox': zeros, 'loss_obj_bbox': zeros,
                    'loss_sub_giou': zeros, 'loss_obj_giou': zeros}

        # bucket lane width to powers of two (>=128) to bound recompilations
        Mp = max(128, pl.next_power_of_2(Mmax))
        packs = []
        for li, (o, m) in enumerate(zip(layer_outputs, match)):
            Ml = Ms[li]
            pk = jnp.zeros((16, Mp), jnp.float32)
            if Ml:
                bi = jnp.asarray(m['flat'])
                si = jnp.asarray(m['srcq'])
                ps = o['pred_sub_boxes'].reshape(N, Q, 4)[bi, si]    # [Ml,4]
                po = o['pred_obj_boxes'].reshape(N, Q, 4)[bi, si]
                blob = jnp.concatenate([ps, po, jnp.asarray(m['sub']),
                                        jnp.asarray(m['obj'])], axis=1).T  # [16,Ml]
                pk = pk.at[:, :Ml].set(blob)
            packs.append(pk)
        packed = jnp.stack(packs, 0)                                 # [L,16,Mp]
        m_arr = jnp.asarray(np.asarray(Ms, np.int32))

        sums = pl.pallas_call(
            _box_losses_kernel,
            out_shape=jax.ShapeDtypeStruct((L, 5), jnp.float32),
            grid=(L,),
            in_specs=[pl.BlockSpec(memory_space=pltpu.MemorySpace.SMEM),
                      pl.BlockSpec((1, 16, Mp), lambda l: (l, 0, 0))],
            out_specs=pl.BlockSpec(memory_space=pltpu.MemorySpace.SMEM),
            compiler_params=pltpu.CompilerParams(
                dimension_semantics=("arbitrary",)),
        )(m_arr, packed)

        denom = float(num_interactions) * P
        return {'loss_sub_bbox': sums[:, 0] / denom,
                'loss_obj_bbox': sums[:, 1] / (sums[:, 4] + 0.0001),
                'loss_sub_giou': sums[:, 2] / denom,
                'loss_obj_giou': sums[:, 3] / (sums[:, 4] + 0.0001)}

    # -- forward ---------------------------------------------------------------
    def forward(self, outputs, targets, log, use_consis):
        if use_consis:
            # TODO(synk): consistency losses rely on torch.combinations / data-dependent
            # shapes and the Hungarian pairing structure; no clean static Pallas equivalent.
            raise NotImplementedError("use_consis=True not supported in this Pallas port")

        outputs_without_aux = {k: v for k, v in outputs.items() if k != 'aux_outputs'}
        indices = self.matcher(outputs_without_aux, targets, log)
        num_interactions = sum(len(t['obj_labels']) for t in targets)
        # TODO(synk): torch.distributed all_reduce / world_size -- single host here.
        num_interactions = max(float(num_interactions), 1.0)

        aux = outputs.get('aux_outputs', [])
        layer_outputs = [outputs_without_aux] + list(aux)
        layer_indices = [indices] + [self.matcher(a, targets) for a in aux]
        suffixes = [''] + [f'_{i}' for i in range(len(aux))]

        B, P, Q, _ = outputs['pred_obj_logits'].shape
        N = B * P
        match = [self._layer_match_data(targets, idx, P) for idx in layer_indices]

        losses = {}
        if ('obj_labels' in self.losses) or ('obj_cardinality' in self.losses):
            sums = self._obj_pass(layer_outputs, match, targets)         # [L,3]
            for li, sfx in enumerate(suffixes):
                if 'obj_labels' in self.losses:
                    losses['loss_obj_ce' + sfx] = sums[li, 0] / sums[li, 1]
                if 'obj_cardinality' in self.losses:
                    losses['obj_cardinality_error' + sfx] = sums[li, 2] / float(N)
            if 'obj_labels' in self.losses:
                losses['obj_class_error'] = self._class_error(
                    outputs['pred_obj_logits'], match[0])

        if 'verb_labels' in self.losses:
            verb_losses = self._verb_pass(layer_outputs, match)          # [L]
            for li, sfx in enumerate(suffixes):
                losses['loss_verb_ce' + sfx] = verb_losses[li]

        if 'sub_obj_boxes' in self.losses:
            box = self._box_pass(layer_outputs, match, num_interactions, P)
            for li, sfx in enumerate(suffixes):
                for k in ('loss_sub_bbox', 'loss_obj_bbox',
                          'loss_sub_giou', 'loss_obj_giou'):
                    losses[k + sfx] = box[k][li]

        return losses


# ----------------------------------------------------------------------------
# Deterministic stub matcher (the real Hungarian matcher is external)
# ----------------------------------------------------------------------------

def stub_matcher(outputs, targets, log=None):
    B, P, Q, _ = outputs['pred_obj_logits'].shape
    indices = []
    for b, t in enumerate(targets):
        n = len(t['obj_labels'])
        per_path = []
        for p in range(P):
            src = (np.arange(n, dtype=np.int64) * 2 + p) % Q
            tgt = np.arange(n, dtype=np.int64)
            per_path.append((src, tgt))
        indices.append(per_path)
    return indices


# ----------------------------------------------------------------------------
# Example
# ----------------------------------------------------------------------------

if __name__ == "__main__":
    B, P, Q = 2, 2, 8                 # batch, num_path, num_queries
    NUM_OBJ, NUM_VERB = 4, 4
    N_AUX = 2                          # aux decoder layers (exercise the batched path)

    key = jax.random.PRNGKey(0)

    def make_layer(k):
        k1, k2, k3, k4 = jax.random.split(k, 4)
        return {
            'pred_obj_logits': jax.random.normal(k1, (B, P, Q, NUM_OBJ + 1), jnp.float32),
            'pred_verb_logits': jax.random.normal(k2, (B, P, Q, NUM_VERB), jnp.float32),
            'pred_sub_boxes': jax.nn.sigmoid(jax.random.normal(k3, (B, P, Q, 4), jnp.float32)),
            'pred_obj_boxes': jax.nn.sigmoid(jax.random.normal(k4, (B, P, Q, 4), jnp.float32)),
        }

    keys = jax.random.split(key, N_AUX + 1)
    outputs = make_layer(keys[0])
    outputs['aux_outputs'] = [make_layer(k) for k in keys[1:]]

    targets = [
        {'obj_labels': np.array([1, 3], np.int32),
         'verb_labels': np.array([[1, 0, 0, 1], [0, 1, 0, 0]], np.float32),
         'sub_boxes': np.array([[0.5, 0.5, 0.2, 0.2], [0.3, 0.4, 0.1, 0.2]], np.float32),
         'obj_boxes': np.array([[0.6, 0.6, 0.2, 0.3], [0.0, 0.0, 0.0, 0.0]], np.float32)},
        {'obj_labels': np.array([2], np.int32),
         'verb_labels': np.array([[0, 0, 1, 0]], np.float32),
         'sub_boxes': np.array([[0.7, 0.2, 0.2, 0.1]], np.float32),
         'obj_boxes': np.array([[0.4, 0.5, 0.3, 0.2]], np.float32)},
    ]

    criterion = SetCriterionHOI(
        num_obj_classes=NUM_OBJ, num_queries=Q, num_verb_classes=NUM_VERB,
        matcher=stub_matcher,
        weight_dict={'loss_obj_ce': 1.0, 'loss_verb_ce': 1.0,
                     'loss_sub_bbox': 2.5, 'loss_obj_bbox': 2.5,
                     'loss_sub_giou': 1.0, 'loss_obj_giou': 1.0},
        eos_coef=0.1,
        losses=['obj_labels', 'obj_cardinality', 'verb_labels', 'sub_obj_boxes'],
        verb_loss_type='focal',
    )

    losses = criterion.forward(outputs, targets, log=True, use_consis=False)
    jax.block_until_ready([v for v in losses.values()])
    print("KERNEL_OK")
</pallas_src>

<mosaic_0001>
module attributes {stable_mosaic.version = 11 : i64} {
  func.func @_obj_ce_card_kernel(%arg0: i32, %arg1: i32, %arg2: memref<1x4x8x5xf32, #tpu.memory_space<vmem>>, %arg3: memref<1x4x8xi32, #tpu.memory_space<vmem>>, %arg4: memref<1x4x1xf32, #tpu.memory_space<vmem>>, %arg5: memref<3x3xf32, #tpu.memory_space<smem>>, %arg6: memref<2x4x8xf32, #tpu.memory_space<vmem>>, %arg7: memref<4x1xf32, #tpu.memory_space<vmem>>) attributes {dimension_semantics = [#tpu.dimension_semantics<arbitrary>, #tpu.dimension_semantics<arbitrary>], iteration_bounds = array<i64: 3, 1>, scalar_prefetch = 0 : i64, scratch_operands = 2 : i64, tpu.core_type = #tpu.core_type<tc>, window_params = [{transform_indices = @transform_0, window_bounds = array<i64: 1, 4, 8, 5>}, {transform_indices = @transform_1, window_bounds = array<i64: 1, 4, 8>}, {transform_indices = @transform_2, window_bounds = array<i64: 1, 4, 1>}, {transform_indices = @transform_3, window_bounds = array<i64: 3, 3>}]} {
    %c0_i32 = arith.constant 0 : i32
    %0 = arith.cmpi eq, %arg1, %c0_i32 : i32
    %1 = arith.extui %0 : i1 to i32
    %c0_i32_0 = arith.constant 0 : i32
    %2 = arith.cmpi ne, %1, %c0_i32_0 : i32
    scf.if %2 {
      %cst_36 = arith.constant 0.000000e+00 : f32
      %78 = vector.broadcast %cst_36 : f32 to vector<2x4x8xf32>
      %c0_37 = arith.constant 0 : index
      %c0_38 = arith.constant 0 : index
      %c0_39 = arith.constant 0 : index
      %79 = vector.load %arg6[%c0_37, %c0_38, %c0_39] : memref<2x4x8xf32, #tpu.memory_space<vmem>>, vector<2x4x8xf32>
      tpu.vector_store %arg6[%c0_37, %c0_38, %c0_39], %78 {strides = array<i32>} : memref<2x4x8xf32, #tpu.memory_space<vmem>>, vector<2x4x8xf32>,
      %cst_40 = arith.constant 0.000000e+00 : f32
      %80 = vector.broadcast %cst_40 : f32 to vector<4x1xf32>
      %c0_41 = arith.constant 0 : index
      %c0_42 = arith.constant 0 : index
      %81 = vector.load %arg7[%c0_41, %c0_42] : memref<4x1xf32, #tpu.memory_space<vmem>>, vector<4x1xf32>
      tpu.vector_store %arg7[%c0_41, %c0_42], %80 {strides = array<i32>} : memref<4x1xf32, #tpu.memory_space<vmem>>, vector<4x1xf32>,
    } else {
    }
    %c0 = arith.constant 0 : index
    %c0_1 = arith.constant 0 : index
    %c0_2 = arith.constant 0 : index
    %c0_3 = arith.constant 0 : index
    %3 = vector.load %arg2[%c0, %c0_1, %c0_2, %c0_3] : memref<1x4x8x5xf32, #tpu.memory_space<vmem>>, vector<1x4x8x5xf32>
    %4 = vector.shape_cast %3 : vector<1x4x8x5xf32> to vector<4x8x5xf32>
    %c0_4 = arith.constant 0 : index
    %c0_5 = arith.constant 0 : index
    %c0_6 = arith.constant 0 : index
    %5 = vector.load %arg3[%c0_4, %c0_5, %c0_6] : memref<1x4x8xi32, #tpu.memory_space<vmem>>, vector<1x4x8xi32>
    %6 = vector.shape_cast %5 : vector<1x4x8xi32> to vector<4x8xi32>
    %c0_7 = arith.constant 0 : index
    %c0_8 = arith.constant 0 : index
    %c0_9 = arith.constant 0 : index
    %7 = vector.load %arg4[%c0_7, %c0_8, %c0_9] : memref<1x4x1xf32, #tpu.memory_space<vmem>>, vector<1x4x1xf32>
    %8 = vector.shape_cast %7 : vector<1x4x1xf32> to vector<4x1xf32>
    %c4_i32 = arith.constant 4 : i32
    %9 = arith.muli %arg1, %c4_i32 : i32
    %10 = tpu.iota {dimensions = array<i32: 0>} : vector<4x1xi32>
    %11 = vector.broadcast %9 : i32 to vector<4x1xi32>
    %12 = arith.addi %11, %10 : vector<4x1xi32>
    %c4_i32_10 = arith.constant 4 : i32
    %13 = vector.broadcast %c4_i32_10 : i32 to vector<4x1xi32>
    %14 = arith.cmpi slt, %12, %13 : vector<4x1xi32>
    %15 = arith.extui %14 : vector<4x1xi1> to vector<4x1xi32>
    %16 = arith.sitofp %15 : vector<4x1xi32> to vector<4x1xf32>
    %17 = vector.shape_cast %14 : vector<4x1xi1> to vector<4x1x1xi1>
    %cst = arith.constant 0.000000e+00 : f32
    %18 = vector.shape_cast %17 : vector<4x1x1xi1> to vector<4x1x1xi1>
    %19 = vector.broadcast %18 : vector<4x1x1xi1> to vector<4x8x5xi1>
    %20 = vector.broadcast %cst : f32 to vector<4x8x5xf32>
    %21 = arith.select %19, %4, %20 : vector<4x8x5xi1>, vector<4x8x5xf32>
    %cst_11 = arith.constant dense<0xFF800000> : vector<4x8xf32>
    %22 = vector.multi_reduction <maximumf>, %21, %cst_11 [2] : vector<4x8x5xf32> to vector<4x8xf32>
    %23 = vector.shape_cast %22 : vector<4x8xf32> to vector<4x8x1xf32>
    %24 = vector.broadcast %23 : vector<4x8x1xf32> to vector<4x8x5xf32>
    %25 = arith.subf %21, %24 : vector<4x8x5xf32>
    %26 = math.exp %25 : vector<4x8x5xf32>
    %cst_12 = arith.constant dense<0.000000e+00> : vector<4x8xf32>
    %27 = vector.multi_reduction <add>, %26, %cst_12 [2] : vector<4x8x5xf32> to vector<4x8xf32>
    %28 = vector.shape_cast %27 : vector<4x8xf32> to vector<4x8x1xf32>
    %29 = math.log %28 : vector<4x8x1xf32>
    %30 = arith.addf %29, %23 : vector<4x8x1xf32>
    %31 = tpu.iota {dimensions = array<i32: 2>} : vector<4x8x5xi32>
    %32 = vector.shape_cast %6 : vector<4x8xi32> to vector<4x8x1xi32>
    %33 = vector.broadcast %32 : vector<4x8x1xi32> to vector<4x8x5xi32>
    %34 = arith.cmpi eq, %31, %33 : vector<4x8x5xi32>
    %35 = arith.extui %34 : vector<4x8x5xi1> to vector<4x8x5xi32>
    %36 = arith.sitofp %35 : vector<4x8x5xi32> to vector<4x8x5xf32>
    %37 = arith.mulf %36, %21 : vector<4x8x5xf32>
    %cst_13 = arith.constant dense<0.000000e+00> : vector<4x8xf32>
    %38 = vector.multi_reduction <add>, %37, %cst_13 [2] : vector<4x8x5xf32> to vector<4x8xf32>
    %39 = vector.shape_cast %30 : vector<4x8x1xf32> to vector<4x8xf32>
    %40 = arith.subf %39, %38 : vector<4x8xf32>
    %c4_i32_14 = arith.constant 4 : i32
    %41 = vector.broadcast %c4_i32_14 : i32 to vector<4x8xi32>
    %42 = arith.cmpi eq, %6, %41 : vector<4x8xi32>
    %cst_15 = arith.constant 1.000000e-01 : f32
    %cst_16 = arith.constant 1.000000e+00 : f32
    %43 = vector.broadcast %cst_15 : f32 to vector<4x8xf32>
    %44 = vector.broadcast %cst_16 : f32 to vector<4x8xf32>
    %45 = arith.select %42, %43, %44 : vector<4x8xi1>, vector<4x8xf32>
    %46 = vector.broadcast %16 : vector<4x1xf32> to vector<4x8xf32>
    %47 = arith.mulf %45, %46 : vector<4x8xf32>
    %c0_17 = arith.constant 0 : index
    %c0_18 = arith.constant 0 : index
    %c0_19 = arith.constant 0 : index
    %48 = vector.load %arg6[%c0_17, %c0_18, %c0_19] : memref<2x4x8xf32, #tpu.memory_space<vmem>>, vector<1x4x8xf32>
    %49 = vector.shape_cast %48 : vector<1x4x8xf32> to vector<4x8xf32>
    %50 = arith.mulf %47, %40 : vector<4x8xf32>
    %51 = arith.addf %49, %50 : vector<4x8xf32>
    %c0_20 = arith.constant 0 : index
    %c0_21 = arith.constant 0 : index
    %c0_22 = arith.constant 0 : index
    %52 = vector.load %arg6[%c0_20, %c0_21, %c0_22] : memref<2x4x8xf32, #tpu.memory_space<vmem>>, vector<1x4x8xf32>
    %53 = vector.shape_cast %52 : vector<1x4x8xf32> to vector<4x8xf32>
    %54 = vector.shape_cast %51 : vector<4x8xf32> to vector<1x4x8xf32>
    tpu.vector_store %arg6[%c0_20, %c0_21, %c0_22], %54 {strides = array<i32>} : memref<2x4x8xf32, #tpu.memory_space<vmem>>, vector<1x4x8xf32>,
    %c1 = arith.constant 1 : index
    %c0_23 = arith.constant 0 : index
    %c0_24 = arith.constant 0 : index
    %55 = vector.load %arg6[%c1, %c0_23, %c0_24] : memref<2x4x8xf32, #tpu.memory_space<vmem>>, vector<1x4x8xf32>
    %56 = vector.shape_cast %55 : vector<1x4x8xf32> to vector<4x8xf32>
    %57 = arith.addf %56, %47 : vector<4x8xf32>
    %c1_25 = arith.constant 1 : index
    %c0_26 = arith.constant 0 : index
    %c0_27 = arith.constant 0 : index
    %58 = vector.load %arg6[%c1_25, %c0_26, %c0_27] : memref<2x4x8xf32, #tpu.memory_space<vmem>>, vector<1x4x8xf32>
    %59 = vector.shape_cast %58 : vector<1x4x8xf32> to vector<4x8xf32>
    %60 = vector.shape_cast %57 : vector<4x8xf32> to vector<1x4x8xf32>
    tpu.vector_store %arg6[%c1_25, %c0_26, %c0_27], %60 {strides = array<i32>} : memref<2x4x8xf32, #tpu.memory_space<vmem>>, vector<1x4x8xf32>,
    %61 = vector.extract_strided_slice %21 {offsets = [0, 0, 4], sizes = [4, 8, 1], strides = [1, 1, 1]} : vector<4x8x5xf32> to vector<4x8x1xf32>
    %62 = vector.extract_strided_slice %21 {offsets = [0, 0, 0], sizes = [4, 8, 4], strides = [1, 1, 1]} : vector<4x8x5xf32> to vector<4x8x4xf32>
    %cst_28 = arith.constant dense<0xFF800000> : vector<4x8xf32>
    %63 = vector.multi_reduction <maximumf>, %62, %cst_28 [2] : vector<4x8x4xf32> to vector<4x8xf32>
    %64 = vector.shape_cast %63 : vector<4x8xf32> to vector<4x8x1xf32>
    %65 = arith.cmpf oge, %64, %61 : vector<4x8x1xf32>
    %66 = arith.extui %65 : vector<4x8x1xi1> to vector<4x8x1xi32>
    %67 = arith.sitofp %66 : vector<4x8x1xi32> to vector<4x8x1xf32>
    %cst_29 = arith.constant dense<0.000000e+00> : vector<4x1xf32>
    %68 = vector.multi_reduction <add>, %67, %cst_29 [1] : vector<4x8x1xf32> to vector<4x1xf32>
    %c0_30 = arith.constant 0 : index
    %c0_31 = arith.constant 0 : index
    %69 = vector.load %arg7[%c0_30, %c0_31] : memref<4x1xf32, #tpu.memory_space<vmem>>, vector<4x1xf32>
    %70 = arith.subf %68, %8 : vector<4x1xf32>
    %71 = math.absf %70 : vector<4x1xf32>
    %72 = arith.mulf %71, %16 : vector<4x1xf32>
    %73 = arith.addf %69, %72 : vector<4x1xf32>
    %c0_32 = arith.constant 0 : index
    %c0_33 = arith.constant 0 : index
    %74 = vector.load %arg7[%c0_32, %c0_33] : memref<4x1xf32, #tpu.memory_space<vmem>>, vector<4x1xf32>
    tpu.vector_store %arg7[%c0_32, %c0_33], %73 {strides = array<i32>} : memref<4x1xf32, #tpu.memory_space<vmem>>, vector<4x1xf32>,
    %c0_i32_34 = arith.constant 0 : i32
    %75 = arith.cmpi eq, %arg1, %c0_i32_34 : i32
    %76 = arith.extui %75 : i1 to i32
    %c0_i32_35 = arith.constant 0 : i32
    %77 = arith.cmpi ne, %76, %c0_i32_35 : i32
    scf.if %77 {
      %c0_36 = arith.constant 0 : index
      %c0_37 = arith.constant 0 : index
      %c0_38 = arith.constant 0 : index
      %78 = vector.load %arg6[%c0_36, %c0_37, %c0_38] : memref<2x4x8xf32, #tpu.memory_space<vmem>>, vector<1x4x8xf32>
      %79 = vector.shape_cast %78 : vector<1x4x8xf32> to vector<4x8xf32>
      %80 = vector.shape_cast %79 : vector<4x8xf32> to vector<1x4x8xf32>
      %cst_39 = arith.constant dense<0.000000e+00> : vector<1xf32>
      %81 = vector.multi_reduction <add>, %80, %cst_39 [1, 2] : vector<1x4x8xf32> to vector<1xf32>
      %82 = vector.shape_cast %81 : vector<1xf32> to vector<1x1x1xf32>
      %83 = vector.extract %82[0, 0, 0] : f32 from vector<1x1x1xf32>
      %84 = arith.index_cast %arg0 : i32 to index
      %c0_40 = arith.constant 0 : index
      %85 = memref.load %arg5[%84, %c0_40] : memref<3x3xf32, #tpu.memory_space<smem>>
      memref.store %83, %arg5[%84, %c0_40] : memref<3x3xf32, #tpu.memory_space<smem>>
      %c1_41 = arith.constant 1 : index
      %c0_42 = arith.constant 0 : index
      %c0_43 = arith.constant 0 : index
      %86 = vector.load %arg6[%c1_41, %c0_42, %c0_43] : memref<2x4x8xf32, #tpu.memory_space<vmem>>, vector<1x4x8xf32>
      %87 = vector.shape_cast %86 : vector<1x4x8xf32> to vector<4x8xf32>
      %88 = vector.shape_cast %87 : vector<4x8xf32> to vector<1x4x8xf32>
      %cst_44 = arith.constant dense<0.000000e+00> : vector<1xf32>
      %89 = vector.multi_reduction <add>, %88, %cst_44 [1, 2] : vector<1x4x8xf32> to vector<1xf32>
      %90 = vector.shape_cast %89 : vector<1xf32> to vector<1x1x1xf32>
      %91 = vector.extract %90[0, 0, 0] : f32 from vector<1x1x1xf32>
      %92 = arith.index_cast %arg0 : i32 to index
      %c1_45 = arith.constant 1 : index
      %93 = memref.load %arg5[%92, %c1_45] : memref<3x3xf32, #tpu.memory_space<smem>>
      memref.store %91, %arg5[%92, %c1_45] : memref<3x3xf32, #tpu.memory_space<smem>>
      %c0_46 = arith.constant 0 : index
      %c0_47 = arith.constant 0 : index
      %94 = vector.load %arg7[%c0_46, %c0_47] : memref<4x1xf32, #tpu.memory_space<vmem>>, vector<4x1xf32>
      %95 = vector.shape_cast %94 : vector<4x1xf32> to vector<1x4x1xf32>
      %cst_48 = arith.constant dense<0.000000e+00> : vector<1xf32>
      %96 = vector.multi_reduction <add>, %95, %cst_48 [1, 2] : vector<1x4x1xf32> to vector<1xf32>
      %97 = vector.shape_cast %96 : vector<1xf32> to vector<1x1x1xf32>
      %98 = vector.extract %97[0, 0, 0] : f32 from vector<1x1x1xf32>
      %99 = arith.index_cast %arg0 : i32 to index
      %c2 = arith.constant 2 : index
      %100 = memref.load %arg5[%99, %c2] : memref<3x3xf32, #tpu.memory_space<smem>>
      memref.store %98, %arg5[%99, %c2] : memref<3x3xf32, #tpu.memory_space<smem>>
    } else {
    }
    return
  }
  func.func @transform_0(%arg0: i32, %arg1: i32) -> (i32, i32, i32, i32) {
    %c0_i32 = arith.constant 0 : i32
    %c0_i32_0 = arith.constant 0 : i32
    %c0_i32_1 = arith.constant 0 : i32
    return %arg0, %arg1, %c0_i32, %c0_i32_0 : i32, i32, i32, i32
  }
  func.func @transform_1(%arg0: i32, %arg1: i32) -> (i32, i32, i32) {
    %c0_i32 = arith.constant 0 : i32
    %c0_i32_0 = arith.constant 0 : i32
    return %arg0, %arg1, %c0_i32 : i32, i32, i32
  }
  func.func @transform_2(%arg0: i32, %arg1: i32) -> (i32, i32, i32) {
    %c0_i32 = arith.constant 0 : i32
    %c0_i32_0 = arith.constant 0 : i32
    return %arg0, %arg1, %c0_i32 : i32, i32, i32
  }
  func.func @transform_3(%arg0: i32, %arg1: i32) -> (i32, i32) {
    %c0_i32 = arith.constant 0 : i32
    %c0_i32_0 = arith.constant 0 : i32
    %c0_i32_1 = arith.constant 0 : i32
    return %c0_i32, %c0_i32_0 : i32, i32
  }
}

</mosaic_0001>

<llo_original>
// kernel: tpu_custom_call.1
$region0: #{tpu_custom_call.1}
  #allocation0 [shape = 'u32[]', space=smem, size = 0x4, offset = 0x4, fixed_abs, tag = 'smem constant byte address 0x4 - core index']
  #allocation1 [shape = 'u32[144,128]{1,0:T(1,128)}', space=vmem, size = 0x12000, scoped, tag = 'internal scratch']
  #allocation2 [shape = 'f32[2,4,8]{2,1,0:T(4,128)}', space=vmem, size = 0x1000, scoped, tag = 'scratch operand']
  #allocation3 [shape = 'f32[4,1]{1,0:T(4,128)}', space=vmem, size = 0x800, scoped, tag = 'scratch operand']
  %s0 = inlined_call_operand.vmem [shape: f32[3,4,8,5], index: 0, kind: input, shape index: {}]
  %s1 = inlined_call_operand.vmem [shape: s32[3,4,8], index: 1, kind: input, shape index: {}]
  %s2 = inlined_call_operand.vmem [shape: f32[3,4,1], index: 2, kind: input, shape index: {}]
  %s3 = inlined_call_operand.hbm [shape: f32[3,3], index: 3, kind: output, shape index: {}]
  %s4 = sld [smem:[#allocation0]]
  $region53: #{tpu_custom_call.1} parent=0
    _
  %s6 = ssub.s32 1, %s4
  %s7 = scalar_select 0, %s6, %s4
  $region1: #{tpu_custom_call.1} parent=0
    #allocation4 [shape = 'u8[2048]{0}', space=smem, size = 0x800, scoped, tag = 'output window, operand 0, single buffered']
    #allocation5 [shape = 's32[2]{0}', space=sflag, size = 0x8, scoped, tag = 'scoped memory for tpu_custom_call.1']
    %8 = vsyncpa [#allocation5], 0
    loop: start=0, step=1, limit=5
    $region2: #{tpu_custom_call.1} parent=1 // loop_pre_header
      _
    $region3: #{tpu_custom_call.1} parent=1 // loop_header
      %s10 = sphi 0, %s14
      %p11 = scmp.ge.s32.totalorder %s10, 5
      %s17 = sphi 0, %s29
      %s18 = sphi 0, %s25
      %s19 = sphi 0, %s17
      %s20 = sphi 0, %s18
      %s21 = sphi 0, %s19
      %s22 = sphi 0, %s20
      %s34 = sphi 0, %s36
      %s37 = sphi 0, %s34
      %s38 = sphi 0, %s37
      %s54 = sphi 0, %s38
      %s62 = sphi 0, %s64
      %s65 = sphi 0, %s62
      %s66 = sphi 0, %s65
      %s82 = sphi 0, %s66
      %s90 = sphi 0, %s92
      %s93 = sphi 0, %s90
      %s94 = sphi 0, %s93
      %s110 = sphi 0, %s94
      %s114 = sphi 0, %s114
      %s116 = sphi 0, %s114
      %s117 = sphi 0, %s116
      %s131 = sphi 0, %s117
    $region4: #{tpu_custom_call.1} parent=1 // loop_header_branch
      %13 = sbr.rel (%p11) target = $region8
    $region5: #{tpu_custom_call.1} parent=1 // loop_body
      %s15 = ssub.s32 %s10, 1
      %s16 = ssub.s32 %s10, 2
      %s23 = sadd.s32 1, %s18
      %p24 = scmp.ge.s32.totalorder %s23, 1
      %s25 = scalar_select %p24, 0, %s23
      %s26 = sadd.s32 1, %s17
      %s27 = scalar_select %p24, %s26, %s17
      %p28 = scmp.ge.s32.totalorder %s27, 3
      %s29 = scalar_select %p28, 0, %s27
      %s30 = ssub.s32 %s17, %s29
      %s31 = ssub.s32 %s18, %s25
      %s32 = sor.u32 %s30, %s31
      %p33 = scmp.eq.s32.totalorder %s32, 0
      %s35 = sadd.s32 %s34, 1
      %s36 = scalar_select %p33, %s34, %s35
      %p39 = pneg %p33
      %p40 = scmp.eq.s32.totalorder %s10, 2
      %p41 = por %p39, %p40
      %p42 = scmp.ne.s32.totalorder %s34, %s37
      %p43 = scmp.eq.s32.totalorder %s10, 0
      %p44 = por %p42, %p43
      %p45 = scmp.ne.s32.totalorder %s34, %s37
      %p46 = scmp.eq.s32.totalorder %s15, 2
      %p47 = por %p45, %p46
      %p48 = scmp.ne.s32.totalorder %s37, %s38
      %p49 = scmp.eq.s32.totalorder %s15, 0
      %p50 = por %p48, %p49
      %p51 = scmp.ne.s32.totalorder %s37, %s38
      %p52 = scmp.eq.s32.totalorder %s16, 2
      %p53 = por %p51, %p52
      %p55 = scmp.ne.s32.totalorder %s38, %s54
      %p56 = scmp.eq.s32.totalorder %s16, 0
      %p57 = por %p55, %p56
      %s58 = ssub.s32 %s17, %s29
      %s59 = ssub.s32 %s18, %s25
      %s60 = sor.u32 %s58, %s59
      %p61 = scmp.eq.s32.totalorder %s60, 0
      %s63 = sadd.s32 %s62, 1
      %s64 = scalar_select %p61, %s62, %s63
      %p67 = pneg %p61
      %p68 = scmp.eq.s32.totalorder %s10, 2
      %p69 = por %p67, %p68
      %p70 = scmp.ne.s32.totalorder %s62, %s65
      %p71 = scmp.eq.s32.totalorder %s10, 0
      %p72 = por %p70, %p71
      %p73 = scmp.ne.s32.totalorder %s62, %s65
      %p74 = scmp.eq.s32.totalorder %s15, 2
      %p75 = por %p73, %p74
      %p76 = scmp.ne.s32.totalorder %s65, %s66
      %p77 = scmp.eq.s32.totalorder %s15, 0
      %p78 = por %p76, %p77
      %p79 = scmp.ne.s32.totalorder %s65, %s66
      %p80 = scmp.eq.s32.totalorder %s16, 2
      %p81 = por %p79, %p80
      %p83 = scmp.ne.s32.totalorder %s66, %s82
      %p84 = scmp.eq.s32.totalorder %s16, 0
      %p85 = por %p83, %p84
      %s86 = ssub.s32 %s17, %s29
      %s87 = ssub.s32 %s18, %s25
      %s88 = sor.u32 %s86, %s87
      %p89 = scmp.eq.s32.totalorder %s88, 0
      %s91 = sadd.s32 %s90, 1
      %s92 = scalar_select %p89, %s90, %s91
      %p95 = pneg %p89
      %p96 = scmp.eq.s32.totalorder %s10, 2
      %p97 = por %p95, %p96
      %p98 = scmp.ne.s32.totalorder %s90, %s93
      %p99 = scmp.eq.s32.totalorder %s10, 0
      %p100 = por %p98, %p99
      %p101 = scmp.ne.s32.totalorder %s90, %s93
      %p102 = scmp.eq.s32.totalorder %s15, 2
      %p103 = por %p101, %p102
      %p104 = scmp.ne.s32.totalorder %s93, %s94
      %p105 = scmp.eq.s32.totalorder %s15, 0
      %p106 = por %p104, %p105
      %p107 = scmp.ne.s32.totalorder %s93, %s94
      %p108 = scmp.eq.s32.totalorder %s16, 2
      %p109 = por %p107, %p108
      %p111 = scmp.ne.s32.totalorder %s94, %s110
      %p112 = scmp.eq.s32.totalorder %s16, 0
      %p113 = por %p111, %p112
      %s115 = sadd.s32 %s114, 1
      %p118 = scmp.eq.s32.totalorder %s10, 2
      %p119 = scmp.ne.s32.totalorder %s114, %s116
      %p120 = scmp.eq.s32.totalorder %s10, 0
      %p121 = por %p119, %p120
      %p122 = scmp.ne.s32.totalorder %s114, %s116
      %p123 = scmp.eq.s32.totalorder %s15, 2
      %p124 = por %p122, %p123
      %p125 = scmp.ne.s32.totalorder %s116, %s117
      %p126 = scmp.eq.s32.totalorder %s15, 0
      %p127 = por %p125, %p126
      %p128 = scmp.ne.s32.totalorder %s116, %s117
      %p129 = scmp.eq.s32.totalorder %s16, 2
      %p130 = por %p128, %p129
      %p132 = scmp.ne.s32.totalorder %s117, %s131
      %p133 = scmp.eq.s32.totalorder %s16, 0
      %p134 = por %p132, %p133
      %p135 = scmp.le.s32.totalorder 1, %s10
      %p136 = scmp.lt.s32.totalorder %s10, 4
      %p137 = pnand %p135, %p136
      %p138 = pneg %p137
      // Predicated region
      $region9: #{tpu_custom_call.1} parent=5 // pred_check
        _
      $region10: #{tpu_custom_call.1} parent=5 // pred_check_branch
        %140 = sbr.rel (%p137) target = $region12
      $region11: #{tpu_custom_call.1} parent=5 // pred_region
        %s141 = ssub.s32 %s10, 1
      $region12: #{tpu_custom_call.1} parent=5 // pred_fallthru
        _
      %p142 = scmp.lt.s32.totalorder %s10, 3
      // Predicated region
      $region13: #{tpu_custom_call.1} parent=5 // pred_check
        %p143 = pneg %p142
      $region14: #{tpu_custom_call.1} parent=5 // pred_check_branch
        %145 = sbr.rel (%p143) target = $region16
      $region15: #{tpu_custom_call.1} parent=5 // pred_region
        // Predicated region
        $region17: #{tpu_custom_call.1} parent=15 // pred_check
          %p146 = pneg %p44
        $region18: #{tpu_custom_call.1} parent=15 // pred_check_branch
          %148 = sbr.rel (%p146) target = $region20
        $region19: #{tpu_custom_call.1} parent=15 // pred_region
          %s149 = smul.u32 4, %s18
          %p150 = scmp.lt.s32.totalorder %s17, 2
          %s151 = scalar_select %p150, %s17, 2
          %p152 = scmp.lt.s32.totalorder %s149, 3
          %s153 = scalar_select %p152, %s149, 3
          %s154 = smul.addr %s151, 4
          %s155 = sadd.s32 %s153, %s154
          %s156 = smul.addr %s155, 8
          %s157 = scalar_lea.vmem %s0, %s156
          %s158 = smul.u32 4, %s18
        $region20: #{tpu_custom_call.1} parent=15 // pred_fallthru
          _
        // Predicated region
        $region21: #{tpu_custom_call.1} parent=15 // pred_check
          %p159 = pneg %p72
        $region22: #{tpu_custom_call.1} parent=15 // pred_check_branch
          %161 = sbr.rel (%p159) target = $region24
        $region23: #{tpu_custom_call.1} parent=15 // pred_region
          %p162 = scmp.lt.s32.totalorder %s17, 2
          %s163 = scalar_select %p162, %s17, 2
          %p164 = scmp.lt.s32.totalorder %s18, 0
          %s165 = scalar_select %p164, %s18, 0
          %s166 = sadd.s32 %s165, %s163
          %s167 = smul.addr %s166, 4
          %s168 = scalar_lea.vmem %s1, %s167
        $region24: #{tpu_custom_call.1} parent=15 // pred_fallthru
          _
        // Predicated region
        $region25: #{tpu_custom_call.1} parent=15 // pred_check
          %p169 = pneg %p100
        $region26: #{tpu_custom_call.1} parent=15 // pred_check_branch
          %171 = sbr.rel (%p169) target = $region28
        $region27: #{tpu_custom_call.1} parent=15 // pred_region
          %p172 = scmp.lt.s32.totalorder %s17, 2
          %s173 = scalar_select %p172, %s17, 2
          %p174 = scmp.lt.s32.totalorder %s18, 0
          %s175 = scalar_select %p174, %s18, 0
          %s176 = sadd.s32 %s175, %s173
          %s177 = smul.addr %s176, 4
          %s178 = scalar_lea.vmem %s2, %s177
        $region28: #{tpu_custom_call.1} parent=15 // pred_fallthru
          _
      $region16: #{tpu_custom_call.1} parent=5 // pred_fallthru
        _
      %p179 = scmp.le.s32.totalorder 1, %s10
      %p180 = scmp.lt.s32.totalorder %s10, 4
      %p181 = pnand %p179, %p180
      %p182 = pneg %p181
      // Predicated region
      $region29: #{tpu_custom_call.1} parent=5 // pred_check
        _
      $region30: #{tpu_custom_call.1} parent=5 // pred_check_branch
        %184 = sbr.rel (%p181) target = $region32
      $region31: #{tpu_custom_call.1} parent=5 // pred_region
        %s185 = ssub.s32 %s10, 1
        %s186 = smul.u32 4, %s20
        %p187 = scmp.lt.s32.totalorder %s19, 2
        %s188 = scalar_select %p187, %s19, 2
        %p189 = scmp.lt.s32.totalorder %s186, 3
        %s190 = scalar_select %p189, %s186, 3
        %s191 = smul.addr %s188, 4
        %s192 = sadd.s32 %s190, %s191
        %s193 = smul.addr %s192, 8
        %s194 = scalar_lea.vmem %s0, %s193
        %p195 = pneg %p50
        %p196 = pneg %p47
        %p197 = scmp.lt.s32.totalorder %s19, 2
        %s198 = scalar_select %p197, %s19, 2
        %p199 = scmp.lt.s32.totalorder %s20, 0
        %s200 = scalar_select %p199, %s20, 0
        %s201 = sadd.s32 %s200, %s198
        %s202 = smul.addr %s201, 4
        %s203 = scalar_lea.vmem %s1, %s202
        %p204 = pneg %p78
        %p205 = pneg %p75
        %p206 = scmp.lt.s32.totalorder %s19, 2
        %s207 = scalar_select %p206, %s19, 2
        %p208 = scmp.lt.s32.totalorder %s20, 0
        %s209 = scalar_select %p208, %s20, 0
        %s210 = sadd.s32 %s209, %s207
        %s211 = smul.addr %s210, 4
        %s212 = scalar_lea.vmem %s2, %s211
        %p213 = pneg %p106
        %p214 = pneg %p103
        %p215 = pneg %p127
        %p216 = pneg %p124
        %s217 = smul.u32 4, %s20
        %p218 = scmp.lt.s32.totalorder %s19, 2
        %s219 = scalar_select %p218, %s19, 2
        %p220 = scmp.lt.s32.totalorder %s217, 3
        %s221 = scalar_select %p220, %s217, 3
        %s222 = smul.addr %s219, 4
        %s223 = sadd.s32 %s221, %s222
        %s224 = smul.addr %s223, 8
        %s225 = scalar_lea.vmem %s0, %s224
        %s226 = smul.u32 4, %s20
        %p227 = scmp.lt.s32.totalorder %s19, 2
        %s228 = scalar_select %p227, %s19, 2
        %p229 = scmp.lt.s32.totalorder %s20, 0
        %s230 = scalar_select %p229, %s20, 0
        %s231 = sadd.s32 %s230, %s228
        %s232 = smul.addr %s231, 4
        %s233 = scalar_lea.vmem %s1, %s232
        %p234 = scmp.lt.s32.totalorder %s19, 2
        %s235 = scalar_select %p234, %s19, 2
        %p236 = scmp.lt.s32.totalorder %s20, 0
        %s237 = scalar_select %p236, %s20, 0
        %s238 = sadd.s32 %s237, %s235
        %s239 = smul.addr %s238, 4
        %s240 = scalar_lea.vmem %s2, %s239
        %p241 = scmp.eq.s32.totalorder %s20, 0
        // Predicated region
        $region33: #{tpu_custom_call.1} parent=31 // pred_check
          %p242 = pneg %p241
        $region34: #{tpu_custom_call.1} parent=31 // pred_check_branch
          %244 = sbr.rel (%p242) target = $region36
        $region35: #{tpu_custom_call.1} parent=31 // pred_region
          %vm245 = vcmask 60416
          %246 = vst.msk [vmem:[#allocation2] sm:$0xf] %vm245, 0.0
          %247 = vst.msk [vmem:[#allocation2 + $0x4] sm:$0xf] %vm245, 0.0
          %vm248 = vcmask 3072
          %249 = vst.msk [vmem:[#allocation3] sm:$0xf] %vm248, 0.0
        $region36: #{tpu_custom_call.1} parent=31 // pred_fallthru
          _
        %v250 = vld [vmem:[%s225] sm:$0xff]
        %v251 = vld [vmem:[%s225 + $0x8] sm:$0xff]
        %v252 = vld [vmem:[%s225 + $0x10] sm:$0xff]
        %v253 = vld [vmem:[%s225 + $0x18] sm:$0xff]
        %v254 = vld [vmem:[%s233] sm:$0xf]
        %v255 = vld [vmem:[%s240] sm:$0xf]
        %s256 = smul.u32 %s20, 4
        %v257 = vlaneseq
        %v258 = vshrl.u32 %v257, 7
        %v259 = vstv %s256
        %v260 = vadd.s32 %v259, %v258
        %vm261 = vcmp.lt.s32.totalorder %v260, 4
        %v262 = vsel %vm261, 1, 0
        %v263 = vcvt.s32.f32 %v262
        %v264 = vlaneseq
        %v265 = vshrl.u32 %v264, 7
        %v266 = vsub.s32 0, %v265
        %v267 = vrot.slane %v262, %v266
        %v268 = vlaneseq
        %v269 = vshrl.u32 %v268, 7
        %v270 = vsub.s32 1, %v269
        %v271 = vrot.slane %v262, %v270
        %v272 = vlaneseq
        %v273 = vshrl.u32 %v272, 7
        %v274 = vsub.s32 2, %v273
        %v275 = vrot.slane %v262, %v274
        %v276 = vlaneseq
        %v277 = vshrl.u32 %v276, 7
        %v278 = vsub.s32 3, %v277
        %v279 = vrot.slane %v262, %v278
        %vm280 = vcmp.ne.s32.totalorder %v267, 0
        %vm281 = vcmp.ne.s32.totalorder %v271, 0
        %vm282 = vcmp.ne.s32.totalorder %v275, 0
        %vm283 = vcmp.ne.s32.totalorder %v279, 0
        %v284 = vsel %vm280, 1, 0
        %v285 = vsel %vm281, 1, 0
        %v286 = vsel %vm282, 1, 0
        %v287 = vsel %vm283, 1, 0
        %vm288 = vcmp.eq.s32.totalorder %v284, 1
        %vm289 = vcmp.eq.s32.totalorder %v285, 1
        %vm290 = vcmp.eq.s32.totalorder %v286, 1
        %vm291 = vcmp.eq.s32.totalorder %v287, 1
        %v292 = vsel %vm288, %v250, 0.0
        %v293 = vsel %vm289, %v251, 0.0
        %v294 = vsel %vm290, %v252, 0.0
        %v295 = vsel %vm291, %v253, 0.0
        %vm296 = vcmask 39936
        %v297 = vsel %vm296, %v292, -inf
        %298 = vmax.xlane.f32.xlu0 %v297
        %v299 = vpop.xlane.xlu0 %298
        %v300 = vsel %vm296, %v293, -inf
        %301 = vmax.xlane.f32.xlu0 %v300
        %v302 = vpop.xlane.xlu0 %301
        %v303 = vsel %vm296, %v294, -inf
        %304 = vmax.xlane.f32.xlu0 %v303
        %v305 = vpop.xlane.xlu0 %304
        %v306 = vsel %vm296, %v295, -inf
        %307 = vmax.xlane.f32.xlu0 %v306
        %v308 = vpop.xlane.xlu0 %307
        %v309 = vsub.f32 %v292, %v299
        %v310 = vsub.f32 %v293, %v302
        %v311 = vsub.f32 %v294, %v305
        %v312 = vsub.f32 %v295, %v308
        %v313 = vmul.f32 %v309, 1.442695
        %v314 = vpow.pop %v313
        %v315 = vmul.f32 %v310, 1.442695
        %v316 = vpow.pop %v315
        %v317 = vmul.f32 %v311, 1.442695
        %v318 = vpow.pop %v317
        %v319 = vmul.f32 %v312, 1.442695
        %v320 = vpow.pop %v319
        %v321 = vsel %vm296, %v314, 0.0
        %322 = vadd.xlane.f32.xlu0 %v321
        %v323 = vpop.xlane.xlu0 %322
        %v324 = vsel %vm296, %v316, 0.0
        %325 = vadd.xlane.f32.xlu0 %v324
        %v326 = vpop.xlane.xlu0 %325
        %v327 = vsel %vm296, %v318, 0.0
        %328 = vadd.xlane.f32.xlu0 %v327
        %v329 = vpop.xlane.xlu0 %328
        %v330 = vsel %vm296, %v320, 0.0
        %331 = vadd.xlane.f32.xlu0 %v330
        %v332 = vpop.xlane.xlu0 %331
        %v333 = vlog2.pop %v323
        %v334 = vmul.f32 %v333, 0.6931472
        %v335 = vlog2.pop %v326
        %v336 = vmul.f32 %v335, 0.6931472
        %v337 = vlog2.pop %v329
        %v338 = vmul.f32 %v337, 0.6931472
        %v339 = vlog2.pop %v332
        %v340 = vmul.f32 %v339, 0.6931472
        %v341 = vadd.f32 %v334, %v299
        %v342 = vadd.f32 %v336, %v302
        %v343 = vadd.f32 %v338, %v305
        %v344 = vadd.f32 %v340, %v308
        %v345 = vlaneseq
        %v346 = vand.u32 %v345, 127
        %v347 = vlaneseq
        %v348 = vshrl.u32 %v347, 7
        %v349 = vsub.s32 0, %v348
        %v350 = vrot.slane %v254, %v349
        %352 = vbcast.lane.b32.xlu0 %v350, 256
        %v353 = vpop.permute.xlu0 %352
        %v354 = vlaneseq
        %v355 = vshrl.u32 %v354, 7
        %v356 = vsub.s32 1, %v355
        %v357 = vrot.slane %v254, %v356
        %359 = vbcast.lane.b32.xlu0 %v357, 256
        %v360 = vpop.permute.xlu0 %359
        %v361 = vlaneseq
        %v362 = vshrl.u32 %v361, 7
        %v363 = vsub.s32 2, %v362
        %v364 = vrot.slane %v254, %v363
        %366 = vbcast.lane.b32.xlu0 %v364, 256
        %v367 = vpop.permute.xlu0 %366
        %v368 = vlaneseq
        %v369 = vshrl.u32 %v368, 7
        %v370 = vsub.s32 3, %v369
        %v371 = vrot.slane %v254, %v370
        %373 = vbcast.lane.b32.xlu0 %v371, 256
        %v374 = vpop.permute.xlu0 %373
        %vm375 = vcmp.eq.s32.totalorder %v346, %v353
        %vm376 = vcmp.eq.s32.totalorder %v346, %v360
        %vm377 = vcmp.eq.s32.totalorder %v346, %v367
        %vm378 = vcmp.eq.s32.totalorder %v346, %v374
        %v379 = vsel %vm375, 1, 0
        %v380 = vsel %vm376, 1, 0
        %v381 = vsel %vm377, 1, 0
        %v382 = vsel %vm378, 1, 0
        %v383 = vcvt.s32.f32 %v379
        %v384 = vcvt.s32.f32 %v380
        %v385 = vcvt.s32.f32 %v381
        %v386 = vcvt.s32.f32 %v382
        %v387 = vmul.f32 %v383, %v292
        %v388 = vmul.f32 %v384, %v293
        %v389 = vmul.f32 %v385, %v294
        %v390 = vmul.f32 %v386, %v295
        %v391 = vsel %vm296, %v387, 0.0
        %392 = vadd.xlane.f32.xlu0 %v391
        %v393 = vpop.xlane.xlu0 %392
        %v394 = vsel %vm296, %v388, 0.0
        %395 = vadd.xlane.f32.xlu0 %v394
        %v396 = vpop.xlane.xlu0 %395
        %v397 = vsel %vm296, %v389, 0.0
        %398 = vadd.xlane.f32.xlu0 %v397
        %v399 = vpop.xlane.xlu0 %398
        %v400 = vsel %vm296, %v390, 0.0
        %401 = vadd.xlane.f32.xlu0 %v400
        %v402 = vpop.xlane.xlu0 %401
        %v403 = vsub.f32 %v341, %v393
        %v404 = vsub.f32 %v342, %v396
        %v405 = vsub.f32 %v343, %v399
        %v406 = vsub.f32 %v344, %v402
        %vm407 = vcmp.eq.s32.totalorder %v254, 4
        %v408 = vsel %vm407, 0.1, 1.0
        %v409 = vmul.f32 %v408, %v263
        %v410 = vld [vmem:[#allocation2] sm:$0xf]
        %v415 = vlaneseq
        %v416 = vshrl.u32 %v415, 7
        %v417 = vsub.s32 %v346, %v416
        %v418 = vrot.slane %v403, %v417
        %v419 = vlaneseq
        %v420 = vshrl.u32 %v419, 7
        %v421 = vsub.s32 %v346, %v420
        %v422 = vrot.slane %v404, %v421
        %v423 = vlaneseq
        %v424 = vshrl.u32 %v423, 7
        %v425 = vsub.s32 %v346, %v424
        %v426 = vrot.slane %v405, %v425
        %v427 = vlaneseq
        %v428 = vshrl.u32 %v427, 7
        %v429 = vsub.s32 %v346, %v428
        %v430 = vrot.slane %v406, %v429
        %vm431 = vcmask 1041409
        %v432 = vsel %vm431, %v422, %v418
        %vm433 = vcmask 1042434
        %v434 = vsel %vm433, %v426, %v432
        %vm435 = vcmask 1043459
        %v436 = vsel %vm435, %v430, %v434
        %v438 = vmul.f32 %v409, %v436
        %v439 = vadd.f32 %v410, %v438
        %vm440 = vcmask 60416
        %441 = vst.msk [vmem:[#allocation2] sm:$0xf] %vm440, %v439
        %s442 = scalar_lea.vmem [#allocation2], 4
        %v443 = vld [vmem:[%s442] sm:$0xf]
        %v444 = vadd.f32 %v443, %v409
        %445 = vst.msk [vmem:[%s442] sm:$0xf] %vm440, %v444
        %vm446 = vcmask 31744
        %v447 = vsel %vm446, %v292, -inf
        %448 = vmax.xlane.f32.xlu0 %v447
        %v449 = vpop.xlane.xlu0 %448
        %v450 = vsel %vm446, %v293, -inf
        %451 = vmax.xlane.f32.xlu0 %v450
        %v452 = vpop.xlane.xlu0 %451
        %v453 = vsel %vm446, %v294, -inf
        %454 = vmax.xlane.f32.xlu0 %v453
        %v455 = vpop.xlane.xlu0 %454
        %v456 = vsel %vm446, %v295, -inf
        %457 = vmax.xlane.f32.xlu0 %v456
        %v458 = vpop.xlane.xlu0 %457
        %vm459 = vcmp.ge.f32.partialorder %v449, %v292
        %vm460 = vcmp.ge.f32.partialorder %v452, %v293
        %vm461 = vcmp.ge.f32.partialorder %v455, %v294
        %vm462 = vcmp.ge.f32.partialorder %v458, %v295
        %v463 = vsel %vm459, 1, 0
        %v464 = vsel %vm460, 1, 0
        %v465 = vsel %vm461, 1, 0
        %v466 = vsel %vm462, 1, 0
        %v467 = vcvt.s32.f32 %v463
        %v468 = vcvt.s32.f32 %v464
        %v469 = vcvt.s32.f32 %v465
        %v470 = vcvt.s32.f32 %v466
        %vm471 = vcmask 39968
        %v472 = vsel %vm471, %v467, 0.0
        %v473 = vrot.slane %v472, 4
        %v474 = vadd.f32 %v472, %v473
        %v475 = vrot.slane %v474, 2
        %v476 = vadd.f32 %v474, %v475
        %v477 = vrot.slane %v476, 1
        %v478 = vadd.f32 %v476, %v477
        %v479 = vsel %vm471, %v468, 0.0
        %v480 = vrot.slane %v479, 4
        %v481 = vadd.f32 %v479, %v480
        %v482 = vrot.slane %v481, 2
        %v483 = vadd.f32 %v481, %v482
        %v484 = vrot.slane %v483, 1
        %v485 = vadd.f32 %v483, %v484
        %v486 = vsel %vm471, %v469, 0.0
        %v487 = vrot.slane %v486, 4
        %v488 = vadd.f32 %v486, %v487
        %v489 = vrot.slane %v488, 2
        %v490 = vadd.f32 %v488, %v489
        %v491 = vrot.slane %v490, 1
        %v492 = vadd.f32 %v490, %v491
        %v493 = vsel %vm471, %v470, 0.0
        %v494 = vrot.slane %v493, 4
        %v495 = vadd.f32 %v493, %v494
        %v496 = vrot.slane %v495, 2
        %v497 = vadd.f32 %v495, %v496
        %v498 = vrot.slane %v497, 1
        %v499 = vadd.f32 %v497, %v498
        %v500 = vld [vmem:[#allocation3] sm:$0xf]
        %v502 = vrot.slane %v255, 1
        %v503 = vrot.slane %v255, 2
        %v504 = vrot.slane %v255, 3
        %505 = vrot.lane.b32.xlu0 %v255, 4
        %v506 = vpop.permute.xlu0 %505
        %507 = vrot.lane.b32.xlu0 %v502, 4
        %v508 = vpop.permute.xlu0 %507
        %509 = vrot.lane.b32.xlu0 %v503, 4
        %v510 = vpop.permute.xlu0 %509
        %511 = vrot.lane.b32.xlu0 %v504, 4
        %v512 = vpop.permute.xlu0 %511
        %v517 = vsub.f32 %v478, %v506
        %v518 = vsub.f32 %v485, %v508
        %v519 = vsub.f32 %v492, %v510
        %v520 = vsub.f32 %v499, %v512
        %v521 = vand.u32 2147483647, %v517
        %v522 = vand.u32 2147483647, %v518
        %v523 = vand.u32 2147483647, %v519
        %v524 = vand.u32 2147483647, %v520
        %v526 = vrot.slane %v263, 1
        %v527 = vrot.slane %v263, 2
        %v528 = vrot.slane %v263, 3
        %v533 = vmul.f32 %v521, %v263
        %v534 = vmul.f32 %v522, %v526
        %v535 = vmul.f32 %v523, %v527
        %v536 = vmul.f32 %v524, %v528
        %v541 = vrot.slane %v534, 7
        %v542 = vsel %vm431, %v541, %v533
        %v543 = vrot.slane %v535, 6
        %v544 = vsel %vm433, %v543, %v542
        %v545 = vrot.slane %v536, 5
        %v546 = vsel %vm435, %v545, %v544
        %547 = vrot.lane.b32.xlu0 %v546, 124
        %v548 = vpop.permute.xlu0 %547
        %v550 = vadd.f32 %v500, %v548
        %vm551 = vcmask 3072
        %552 = vst.msk [vmem:[#allocation3] sm:$0xf] %vm551, %v550
        // Predicated region
        $region37: #{tpu_custom_call.1} parent=31 // pred_check
          %p553 = pneg %p241
        $region38: #{tpu_custom_call.1} parent=31 // pred_check_branch
          %555 = sbr.rel (%p553) target = $region40
        $region39: #{tpu_custom_call.1} parent=31 // pred_region
          %v556 = vld [vmem:[#allocation2] sm:$0xf]
          %v557 = vsel %vm440, %v556, 0.0
          %558 = vadd.xlane.f32.xlu0 %v557
          %v559 = vpop.xlane.xlu0 %558
          %v560 = vrot.slane %v559, 4
          %v561 = vadd.f32 %v559, %v560
          %v562 = vrot.slane %v561, 2
          %v563 = vadd.f32 %v561, %v562
          %v564 = vrot.slane %v563, 1
          %v565 = vadd.f32 %v563, %v564
          %s566 = vtos %v565
          %s567 = smul.u32 %s19, 128
          %s568 = scalar_lea.smem [#allocation4], %s567
          %569 = sst [smem:[%s568]] %s566
          %v570 = vld [vmem:[%s442] sm:$0xf]
          %v571 = vsel %vm440, %v570, 0.0
          %572 = vadd.xlane.f32.xlu0 %v571
          %v573 = vpop.xlane.xlu0 %572
          %v574 = vrot.slane %v573, 4
          %v575 = vadd.f32 %v573, %v574
          %v576 = vrot.slane %v575, 2
          %v577 = vadd.f32 %v575, %v576
          %v578 = vrot.slane %v577, 1
          %v579 = vadd.f32 %v577, %v578
          %s580 = vtos %v579
          %s581 = sadd.s32 %s567, 1
          %s582 = scalar_lea.smem [#allocation4], %s581
          %583 = sst [smem:[%s582]] %s580
          %v584 = vld [vmem:[#allocation3] sm:$0xf]
          %v585 = vsel %vm551, %v584, 0.0
          %586 = vadd.xlane.f32.xlu0 %v585
          %v587 = vpop.xlane.xlu0 %586
          %v588 = vrot.slane %v587, 4
          %v589 = vadd.f32 %v587, %v588
          %v590 = vrot.slane %v589, 2
          %v591 = vadd.f32 %v589, %v590
          %v592 = vrot.slane %v591, 1
          %v593 = vadd.f32 %v591, %v592
          %s594 = vtos %v593
          %s595 = sadd.s32 %s567, 2
          %s596 = scalar_lea.smem [#allocation4], %s595
          %597 = sst [smem:[%s596]] %s594
        $region40: #{tpu_custom_call.1} parent=31 // pred_fallthru
          _
        // Predicated region
        $region41: #{tpu_custom_call.1} parent=31 // pred_check
          %p598 = pneg %p124
        $region42: #{tpu_custom_call.1} parent=31 // pred_check_branch
          %600 = sbr.rel (%p598) target = $region44
        $region43: #{tpu_custom_call.1} parent=31 // pred_region
          %s602 = ssub.s32 64, 64
          %603 = vsyncadd [#allocation5], %s602
          %606 = dma.smem_to_hbm [#allocation4], 64, %s3, [#allocation5]
        $region44: #{tpu_custom_call.1} parent=31 // pred_fallthru
          _
        // Predicated region
        $region45: #{tpu_custom_call.1} parent=31 // pred_check
          %p607 = pneg %p124
        $region46: #{tpu_custom_call.1} parent=31 // pred_check_branch
          %609 = sbr.rel (%p607) target = $region48
        $region47: #{tpu_custom_call.1} parent=31 // pred_region
          %610 = dma.done [#allocation5], 64
        $region48: #{tpu_custom_call.1} parent=31 // pred_fallthru
          _
        %611 = sfence
      $region32: #{tpu_custom_call.1} parent=5 // pred_fallthru
        _
      %p612 = scmp.le.s32.totalorder 2, %s10
      // Predicated region
      $region49: #{tpu_custom_call.1} parent=5 // pred_check
        %p613 = pneg %p612
      $region50: #{tpu_custom_call.1} parent=5 // pred_check_branch
        %615 = sbr.rel (%p613) target = $region52
      $region51: #{tpu_custom_call.1} parent=5 // pred_region
        %s616 = ssub.s32 %s10, 2
      $region52: #{tpu_custom_call.1} parent=5 // pred_fallthru
        _
    $region6: #{tpu_custom_call.1} parent=1 // loop_footer
      %s14 = sadd.s32 1, %s10
    $region7: #{tpu_custom_call.1} parent=1 // loop_footer_branch
      %9 = sbr.rel target = $region3
    $region8: #{tpu_custom_call.1} parent=1 // loop_exit
      _
    %617 = vsyncpa [#allocation5], 1
    %s618 = scalar_lea.sflag [#allocation5], 1
    %619 = vsyncpa %s618, 1

</llo_original>
